<compile_context>
chip_gen: v6e
topology: v6e:2x2x1
jax: 0.10.0
libtpu: 0.0.40
codegen_flags: <defaults>
</compile_context>

<pallas_src>
import functools

import jax
import jax.numpy as jnp
from jax.experimental import pallas as pl
from jax.experimental.pallas import tpu as pltpu


def _binary_margin_loss_kernel(x_ref, o_ref, *, margin):
    # Compute in f32 regardless of storage dtype; output is f32 (torch promotion).
    x = x_ref[...].astype(jnp.float32)
    z = jnp.float32(margin) - x                       # margin - output
    one = jnp.float32(1.0)
    # numerically stable logaddexp(1, z) = max(1, z) + log1p(exp(-|1 - z|))
    m = jnp.maximum(one, z)
    o_ref[...] = (m + jnp.log1p(jnp.exp(-jnp.abs(one - z)))).astype(o_ref.dtype)
    # exp + log1p = 2 transcendentals/elem -> EUP; the sub/max/abs/add VPU ops
    # ride along in free bundle slots.  HBM is the ceiling on v5e/v6e.


def _logaddexp_ref(x, margin):
    # plain-XLA path (small tensors) / reference math; matches torch's f32 promotion
    return jnp.logaddexp(jnp.float32(1.0),
                         jnp.float32(margin) - x.astype(jnp.float32))


def _round_up(x, m):
    return ((x + m - 1) // m) * m


def binary_margin_loss(output, margin=0.5, *, min_pallas_elems=65536):
    """Elementwise logaddexp(1.0, margin - output); float32 result (torch promotion).

    `margin` is a static Python float (module hyperparameter); distinct values recompile.
    # TODO(synk): pass margin via SMEM scalar prefetch if it ever needs to be traced.
    """
    orig_shape = output.shape
    total = output.size
    lanes = 128
    out_dtype = jnp.float32   # torch.logaddexp(f32 scalar, x) -> f32 for half/bf16/f32 x

    # Small / medium tensors: stay in XLA so this op fuses with producer & consumers
    # (pallas_call is an opaque custom call and adds a full HBM round trip).
    if total < max(int(min_pallas_elems), lanes):
        return _logaddexp_ref(output, margin).reshape(orig_shape)

    flat = jnp.ravel(output)                     # metadata-only for contiguous arrays
    rows = pl.cdiv(total, lanes)
    padded = rows * lanes
    pad = padded - total
    if pad:
        # Pad only the last partial lane-row (<128 elems).  allow_input_fusion below
        # lets XLA fuse this pad into the kernel operand instead of materialising a
        # full-size padded copy in HBM.
        flat = jnp.pad(flat, (0, pad))
    x2d = flat.reshape(rows, lanes)

    # ---- tile sizing: by bytes (target <= ~4 MiB per VMEM buffer) ---------------
    in_itemsize = jnp.dtype(output.dtype).itemsize
    out_itemsize = jnp.dtype(out_dtype).itemsize
    row_bytes = lanes * max(in_itemsize, out_itemsize)
    MAX_TILE_BYTES = 4 * 1024 * 1024
    max_tile_rows = max(16, (MAX_TILE_BYTES // row_bytes) // 16 * 16)  # 8192 for f32

    if rows > max_tile_rows:
        tile_rows = max_tile_rows
    elif rows > 512:
        # Split into >= 2 grid steps so both of v7x's TensorCores get a block.
        tile_rows = min(max_tile_rows, _round_up(pl.cdiv(rows, 2), 16))
    else:
        tile_rows = rows                          # single block == full array dims
    grid = (pl.cdiv(rows, tile_rows),)            # partial last block masked by Pallas

    cost = pl.CostEstimate(
        flops=5 * padded,                         # sub/max/sub/abs/add (VPU)
        transcendentals=2 * padded,               # exp + log1p per element (EUP)
        bytes_accessed=padded * (in_itemsize + out_itemsize),
    )

    kernel = functools.partial(_binary_margin_loss_kernel, margin=float(margin))

    out2d = pl.pallas_call(
        kernel,
        out_shape=jax.ShapeDtypeStruct((rows, lanes), out_dtype),
        grid_spec=pltpu.PrefetchScalarGridSpec(
            num_scalar_prefetch=0,
            grid=grid,
            in_specs=[pl.BlockSpec((tile_rows, lanes), lambda i: (i, 0))],
            out_specs=pl.BlockSpec((tile_rows, lanes), lambda i: (i, 0)),
        ),
        compiler_params=pltpu.CompilerParams(
            dimension_semantics=("parallel",),        # shard steps across v7x's 2 TCs
            allow_input_fusion=[True],                # fuse tail-pad/reshape into operand
            vmem_limit_bytes=32 * 1024 * 1024,        # 2x(in+out) <= 16 MiB; clears v5e default
        ),
        cost_estimate=cost,
    )(x2d)

    out_flat = out2d.reshape(-1)
    if pad:
        out_flat = out_flat[:total]               # drops only the padded tail elements
    return out_flat.reshape(orig_shape)


if __name__ == "__main__":
    key = jax.random.PRNGKey(0)

    # "output" of some upstream model head; small NCHW-style shape.
    x = jax.random.normal(key, (2, 4, 16, 16), dtype=jnp.float32)
    # Force the Pallas path for this small demo shape (production default keeps
    # small tensors on the fusible plain-jnp path, per perf review).
    y = jax.block_until_ready(binary_margin_loss(x, margin=0.5, min_pallas_elems=0))
    ref = jnp.logaddexp(jnp.float32(1.0), jnp.float32(0.5) - x)
    assert y.shape == x.shape and y.dtype == jnp.float32
    assert jnp.allclose(y, ref, atol=1e-5, rtol=1e-5)

    # Ragged tail (2*4*17*17 = 2312, not a multiple of 128) handled inside one call.
    x2 = jax.random.normal(jax.random.PRNGKey(1), (2, 4, 17, 17), dtype=jnp.float32)
    y2 = jax.block_until_ready(binary_margin_loss(x2, margin=0.5, min_pallas_elems=0))
    ref2 = jnp.logaddexp(jnp.float32(1.0), jnp.float32(0.5) - x2)
    assert y2.shape == x2.shape and y2.dtype == jnp.float32
    assert jnp.allclose(y2, ref2, atol=1e-5, rtol=1e-5)

    # bf16 input: result promotes to float32 (PyTorch type-promotion parity).
    x3 = jax.random.normal(jax.random.PRNGKey(2), (2, 4, 16, 16), dtype=jnp.bfloat16)
    y3 = jax.block_until_ready(binary_margin_loss(x3, margin=0.5, min_pallas_elems=0))
    ref3 = jnp.logaddexp(jnp.float32(1.0), jnp.float32(0.5) - x3.astype(jnp.float32))
    assert y3.dtype == jnp.float32
    assert jnp.allclose(y3, ref3, atol=1e-4, rtol=1e-4)

    # Default threshold: small tensor stays on the fusible jnp path (same numerics).
    y4 = jax.block_until_ready(binary_margin_loss(x, margin=0.5))
    assert y4.dtype == jnp.float32
    assert jnp.allclose(y4, ref, atol=1e-5, rtol=1e-5)

    print("KERNEL_OK")
</pallas_src>

<mosaic_0001>
module attributes {stable_mosaic.version = 11 : i64} {
  func.func @_binary_margin_loss_kernel(%arg0: i32, %arg1: memref<16x128xf32, #tpu.memory_space<vmem>>, %arg2: memref<16x128xf32, #tpu.memory_space<vmem>>) attributes {dimension_semantics = [#tpu.dimension_semantics<parallel>], iteration_bounds = array<i64: 1>, scalar_prefetch = 0 : i64, scratch_operands = 0 : i64, tpu.core_type = #tpu.core_type<tc>, window_params = [{transform_indices = @transform_0, window_bounds = array<i64: 16, 128>}, {transform_indices = @transform_1, window_bounds = array<i64: 16, 128>}]} {
    %c0 = arith.constant 0 : index
    %c0_0 = arith.constant 0 : index
    %0 = vector.load %arg1[%c0, %c0_0] : memref<16x128xf32, #tpu.memory_space<vmem>>, vector<16x128xf32>
    %cst = arith.constant 5.000000e-01 : f32
    %1 = vector.broadcast %cst : f32 to vector<16x128xf32>
    %2 = arith.subf %1, %0 : vector<16x128xf32>
    %cst_1 = arith.constant 1.000000e+00 : f32
    %3 = vector.broadcast %cst_1 : f32 to vector<16x128xf32>
    %4 = arith.maximumf %3, %2 : vector<16x128xf32>
    %cst_2 = arith.constant 1.000000e+00 : f32
    %5 = vector.broadcast %cst_2 : f32 to vector<16x128xf32>
    %6 = arith.subf %5, %2 : vector<16x128xf32>
    %7 = math.absf %6 : vector<16x128xf32>
    %cst_3 = arith.constant 0.000000e+00 : f32
    %8 = vector.broadcast %cst_3 : f32 to vector<16x128xf32>
    %9 = arith.subf %8, %7 : vector<16x128xf32>
    %10 = math.exp %9 : vector<16x128xf32>
    %11 = math.log1p %10 : vector<16x128xf32>
    %12 = arith.addf %4, %11 : vector<16x128xf32>
    %c0_4 = arith.constant 0 : index
    %c0_5 = arith.constant 0 : index
    %13 = vector.load %arg2[%c0_4, %c0_5] : memref<16x128xf32, #tpu.memory_space<vmem>>, vector<16x128xf32>
    tpu.vector_store %arg2[%c0_4, %c0_5], %12 {strides = array<i32>} : memref<16x128xf32, #tpu.memory_space<vmem>>, vector<16x128xf32>,
    return
  }
  func.func @transform_0(%arg0: i32) -> (i32, i32) {
    %c0_i32 = arith.constant 0 : i32
    %c0_i32_0 = arith.constant 0 : i32
    return %arg0, %c0_i32 : i32, i32
  }
  func.func @transform_1(%arg0: i32) -> (i32, i32) {
    %c0_i32 = arith.constant 0 : i32
    %c0_i32_0 = arith.constant 0 : i32
    return %arg0, %c0_i32 : i32, i32
  }
}

</mosaic_0001>

<llo_original>
// kernel: tpu_custom_call.1
$region0: #{tpu_custom_call.1}
  #allocation0 [shape = 'u32[]', space=smem, size = 0x4, offset = 0x4, fixed_abs, tag = 'smem constant byte address 0x4 - core index']
  #allocation1 [shape = 'u32[144,128]{1,0:T(1,128)}', space=vmem, size = 0x12000, scoped, tag = 'internal scratch']
  %s0 = inlined_call_operand.hbm [shape: f32[16,128], index: 0, kind: input, shape index: {}]
  %s1 = inlined_call_operand.hbm [shape: f32[16,128], index: 1, kind: output, shape index: {}]
  %s2 = sld [smem:[#allocation0]]
  $region18: #{tpu_custom_call.1} parent=0
    _
  %s4 = ssub.s32 1, %s2
  %s5 = scalar_select 0, %s4, %s2
  $region1: #{tpu_custom_call.1} parent=0
    #allocation2 [shape = 'u8[8192]{0}', space=vmem, size = 0x2000, scoped, tag = 'input window, operand 0, single buffered']
    #allocation3 [shape = 's32[1]{0}', space=sflag, size = 0x4, scoped, tag = 'scoped memory for tpu_custom_call.1']
    #allocation4 [shape = 's32[1]{0}', space=sflag, size = 0x4, scoped, tag = 'scoped memory for tpu_custom_call.1']
    #allocation5 [shape = 'u8[8192]{0}', space=vmem, size = 0x2000, scoped, tag = 'output window, operand 0, single buffered']
    %6 = vsyncpa [#allocation3], 0
    %7 = vsyncpa [#allocation4], 0
    // Predicated region
    $region2: #{tpu_custom_call.1} parent=1 // pred_check
      _
    $region3: #{tpu_custom_call.1} parent=1 // pred_check_branch
      %9 = sbr.rel (0) target = $region5
    $region4: #{tpu_custom_call.1} parent=1 // pred_region
      %s11 = ssub.s32 256, 256
      %12 = vsyncadd [#allocation3], %s11
      %s13 = sshll.u32 [#allocation2], 4
      %s14 = int_to_ptr.vmem [resolvable:$true] %s13
      %19 = dma.hbm_to_vmem [thread:$0]  %s0, 256, %s14, [#allocation3], 128, 128, 8
    $region5: #{tpu_custom_call.1} parent=1 // pred_fallthru
      _
    // Predicated region
    $region6: #{tpu_custom_call.1} parent=1 // pred_check
      _
    $region7: #{tpu_custom_call.1} parent=1 // pred_check_branch
      %21 = sbr.rel (0) target = $region9
    $region8: #{tpu_custom_call.1} parent=1 // pred_region
      %22 = dma.done [#allocation3], 256
    $region9: #{tpu_custom_call.1} parent=1 // pred_fallthru
      _
    %v23 = vld [vmem:[#allocation2] sm:$0xff]
    %v24 = vld [vmem:[#allocation2 + $0x8] sm:$0xff]
    %v25 = vsub.f32 0.5, %v23
    %v26 = vsub.f32 0.5, %v24
    %v27 = vmax.f32 %v25, 1.0
    %v28 = vmax.f32 %v26, 1.0
    %v29 = vsub.f32 1.0, %v25
    %v30 = vsub.f32 1.0, %v26
    %v31 = vand.u32 2147483647, %v29
    %v32 = vand.u32 2147483647, %v30
    %v33 = vsub.f32 0.0, %v31
    %v34 = vsub.f32 0.0, %v32
    %v35 = vmul.f32 %v33, 1.442695
    %v36 = vpow.pop %v35
    %v37 = vmul.f32 %v34, 1.442695
    %v38 = vpow.pop %v37
    %v39 = vadd.f32 %v36, 1.0
    %v40 = vlog2.pop %v39
    %v41 = vmul.f32 %v40, 0.6931472
    %v42 = vmul.f32 -0.5, %v36
    %v43 = vadd.f32 %v42, 1.0
    %v44 = vmul.f32 %v43, %v36
    %v45 = vand.u32 2147483647, %v36
    %vm46 = vcmp.lt.f32.partialorder %v45, 0.0004427343
    %v47 = vsel %vm46, %v44, %v41
    %v48 = vadd.f32 %v38, 1.0
    %v49 = vlog2.pop %v48
    %v50 = vmul.f32 %v49, 0.6931472
    %v51 = vmul.f32 -0.5, %v38
    %v52 = vadd.f32 %v51, 1.0
    %v53 = vmul.f32 %v52, %v38
    %v54 = vand.u32 2147483647, %v38
    %vm55 = vcmp.lt.f32.partialorder %v54, 0.0004427343
    %v56 = vsel %vm55, %v53, %v50
    %v57 = vadd.f32 %v27, %v47
    %v58 = vadd.f32 %v28, %v56
    %59 = vst [vmem:[#allocation5] sm:$0xff] %v57
    %60 = vst [vmem:[#allocation5 + $0x8] sm:$0xff] %v58
    // Predicated region
    $region10: #{tpu_custom_call.1} parent=1 // pred_check
      _
    $region11: #{tpu_custom_call.1} parent=1 // pred_check_branch
      %62 = sbr.rel (0) target = $region13
    $region12: #{tpu_custom_call.1} parent=1 // pred_region
      %s64 = ssub.s32 256, 256
      %65 = vsyncadd [#allocation4], %s64
      %s66 = sshll.u32 [#allocation5], 4
      %s67 = int_to_ptr.vmem [resolvable:$true] %s66
      %72 = dma.vmem_to_hbm [thread:$0]  %s67, 256, %s1, [#allocation4], 128, 128, 8
    $region13: #{tpu_custom_call.1} parent=1 // pred_fallthru
      _
    // Predicated region
    $region14: #{tpu_custom_call.1} parent=1 // pred_check
      _
    $region15: #{tpu_custom_call.1} parent=1 // pred_check_branch
      %74 = sbr.rel (0) target = $region17
    $region16: #{tpu_custom_call.1} parent=1 // pred_region
      %75 = dma.done [#allocation4], 256
    $region17: #{tpu_custom_call.1} parent=1 // pred_fallthru
      _
    %76 = vsyncpa [#allocation3], 1
    %77 = vsyncpa [#allocation4], 1

</llo_original>
